<compile_context>
chip_gen: v6e
topology: v6e:2x2x1
jax: 0.10.0
libtpu: 0.0.40
codegen_flags: <defaults>
</compile_context>

<pallas_src>
import functools

import jax
import jax.numpy as jnp
from jax import lax
from jax.experimental import pallas as pl
from jax.experimental.pallas import tpu as pltpu

EPS = 1e-5


def _fused_kernel(x_ref, dw_ref, b1_ref, w2_ref, b2_ref, out_ref, *, W):
    # x_ref  : (nb, Cin, L)   channels on sublanes, flattened H*W on lanes
    # dw_ref : (9, Cin, 1)    depthwise tap weights (BN1 scale folded), tap = kh*3+kw
    # b1_ref : (Cin, 1)       BN1 bias (post-scale)
    # w2_ref : (Cout, Cin)    1x1 weights (BN2 scale folded)
    # b2_ref : (Cout, 1)      BN2 bias
    # out_ref: (nb, Cout, L)  channels-first, lane-dense output slab
    nb, Cin, L = x_ref.shape

    x = x_ref[...].astype(jnp.float32)
    dwt = dw_ref[...].astype(jnp.float32)                          # (9, Cin, 1)

    # Lane index over the flattened H*W axis; column-within-row and row masks.
    lane = lax.broadcasted_iota(jnp.int32, (1, L), 1)
    col = lane % W
    not_top = lane >= W            # rows h >= 1   (valid source for the kh=0 taps)
    not_bot = lane < L - W         # rows h <= H-2 (valid source for the kh=2 taps)

    # Width-shifted variants, hoisted out of the 3x3 tap loop (2 XLU rolls + masks).
    x_wm = jnp.where(col == 0, 0.0, pltpu.roll(x, shift=1, axis=2))          # x[h, w-1]
    x_wp = jnp.where(col == W - 1, 0.0, pltpu.roll(x, shift=L - 1, axis=2))  # x[h, w+1]
    xw = (x_wm, x, x_wp)

    # Depthwise 3x3 (stride 1, pad 1); accumulator starts at the folded BN1 bias.
    acc = jnp.broadcast_to(b1_ref[...].astype(jnp.float32), (nb, Cin, L))
    for kw in range(3):
        base = xw[kw]
        for kh in range(3):
            if kh == 0:      # source row h-1
                tap = jnp.where(not_top, pltpu.roll(base, shift=W, axis=2), 0.0)
            elif kh == 2:    # source row h+1
                tap = jnp.where(not_bot, pltpu.roll(base, shift=L - W, axis=2), 0.0)
            else:
                tap = base
            acc = acc + tap * dwt[kh * 3 + kw]

    # ReLU6 (bias already folded into acc init).
    y = jnp.clip(acc, 0.0, 6.0)                                    # (nb, Cin, L)

    # 1x1 pointwise conv on the MXU: (Cout, Cin) x (Cin, L) per image, no relayout.
    w2 = w2_ref[...].astype(jnp.float32)                           # (Cout, Cin)
    b2 = b2_ref[...].astype(jnp.float32)                           # (Cout, 1)
    for i in range(nb):
        oi = lax.dot_general(w2, y[i], (((1,), (0,)), ((), ())),
                             preferred_element_type=jnp.float32)   # (Cout, L)
        out_ref[i] = (oi + b2).astype(out_ref.dtype)


def _pick_batch_block(n):
    # Fat steps amortize the ~0.35us/step overhead and the tiny per-image DMAs.
    # Keep >= 2 grid steps only when each step still carries >= 8 images (so the
    # second v7x TensorCore gets non-trivial work); otherwise one fat step
    # (single-TC v5e/v6e dominate at small batch, and extra steps are pure overhead).
    if n >= 16:
        for nb in (32, 16, 8):
            if n % nb == 0 and n // nb >= 2:
                return nb
    return n


def inverted_residual0(x_nchw, dw_w, bn1, w2, bn2):
    """x_nchw: (N, Cin, H, W). Returns (N, Cout, H, W). Eval-mode BatchNorm."""
    N, Cin, H, W = x_nchw.shape
    Cout = w2.shape[0]
    L = H * W

    g1, beta1, m1, v1 = bn1
    g2, beta2, m2, v2 = bn2
    inv1 = g1 * lax.rsqrt(v1 + EPS)
    inv2 = g2 * lax.rsqrt(v2 + EPS)

    # Fold BN scales into the conv weights; biases stay as per-channel columns.
    # torch depthwise (Cin,1,3,3) -> (9, Cin, 1) with tap index kh*3+kw;
    # torch 1x1 (Cout,Cin,1,1) -> (Cout, Cin).
    dw_taps = (jnp.transpose(dw_w.reshape(Cin, 9), (1, 0)) * inv1
               )[:, :, None].astype(jnp.float32)                   # (9, Cin, 1)
    b1_col = (beta1 - m1 * inv1).reshape(Cin, 1).astype(jnp.float32)
    w2_ck = (w2[:, :, 0, 0] * inv2[:, None]).astype(jnp.float32)   # (Cout, Cin)
    b2_col = (beta2 - m2 * inv2).reshape(Cout, 1).astype(jnp.float32)

    # NCHW -> (N, Cin, H*W): bitcast-compatible reshape, NO transpose / extra HBM pass.
    x_cf = x_nchw.reshape(N, Cin, L)

    nb = _pick_batch_block(N)
    grid = (N // nb,)

    out_flat = pl.pallas_call(
        functools.partial(_fused_kernel, W=W),
        out_shape=jax.ShapeDtypeStruct((N, Cout, L), x_nchw.dtype),
        grid=grid,
        in_specs=[
            pl.BlockSpec((nb, Cin, L), lambda i: (i, 0, 0)),
            pl.BlockSpec((9, Cin, 1), lambda i: (0, 0, 0)),
            pl.BlockSpec((Cin, 1), lambda i: (0, 0)),
            pl.BlockSpec((Cout, Cin), lambda i: (0, 0)),
            pl.BlockSpec((Cout, 1), lambda i: (0, 0)),
        ],
        out_specs=pl.BlockSpec((nb, Cout, L), lambda i: (i, 0, 0)),
        compiler_params=pltpu.CompilerParams(
            dimension_semantics=("parallel",)),
    )(x_cf, dw_taps, b1_col, w2_ck, b2_col)

    # (N, Cout, H*W) -> (N, Cout, H, W): free reshape (no transpose pass).
    return out_flat.reshape(N, Cout, H, W)


def _reference(x_nchw, dw_w, bn1, w2, bn2):
    """Pure-JAX NCHW reference mirroring the PyTorch module (eval-mode BN)."""
    Cin = x_nchw.shape[1]
    g1, beta1, m1, v1 = bn1
    g2, beta2, m2, v2 = bn2
    dn = ('NCHW', 'OIHW', 'NCHW')
    y = lax.conv_general_dilated(x_nchw, dw_w, window_strides=(1, 1),
                                 padding=((1, 1), (1, 1)),
                                 dimension_numbers=dn,
                                 feature_group_count=Cin)
    y = (y - m1[None, :, None, None]) / jnp.sqrt(v1[None, :, None, None] + EPS)
    y = y * g1[None, :, None, None] + beta1[None, :, None, None]
    y = jnp.clip(y, 0.0, 6.0)
    y = lax.conv_general_dilated(y, w2, window_strides=(1, 1),
                                 padding=((0, 0), (0, 0)),
                                 dimension_numbers=dn)
    y = (y - m2[None, :, None, None]) / jnp.sqrt(v2[None, :, None, None] + EPS)
    y = y * g2[None, :, None, None] + beta2[None, :, None, None]
    return y


if __name__ == "__main__":
    key = jax.random.PRNGKey(0)
    N, Cin, Cout, H, W = 2, 8, 16, 16, 16

    ks = jax.random.split(key, 10)
    x = jax.random.normal(ks[0], (N, Cin, H, W), jnp.float32)
    dw_w = jax.random.normal(ks[1], (Cin, 1, 3, 3), jnp.float32) * 0.2
    w2 = jax.random.normal(ks[2], (Cout, Cin, 1, 1), jnp.float32) * 0.2
    bn1 = (jax.random.normal(ks[3], (Cin,)) * 0.1 + 1.0,                    # gamma
           jax.random.normal(ks[4], (Cin,)) * 0.1,                          # beta
           jax.random.normal(ks[5], (Cin,)) * 0.1,                          # running_mean
           jax.random.uniform(ks[6], (Cin,), minval=0.5, maxval=1.5))       # running_var
    bn2 = (jax.random.normal(ks[7], (Cout,)) * 0.1 + 1.0,
           jax.random.normal(ks[8], (Cout,)) * 0.1,
           jax.random.normal(ks[9], (Cout,)) * 0.1,
           jax.random.uniform(ks[0], (Cout,), minval=0.5, maxval=1.5))

    out = inverted_residual0(x, dw_w, bn1, w2, bn2)
    out = jax.block_until_ready(out)

    ref = _reference(x, dw_w, bn1, w2, bn2)
    assert out.shape == (N, Cout, H, W), out.shape
    assert jnp.allclose(out, ref, atol=1e-4, rtol=1e-4), \
        float(jnp.max(jnp.abs(out - ref)))
    print("KERNEL_OK")
</pallas_src>

<mosaic_0001>
module attributes {stable_mosaic.version = 11 : i64} {
  func.func @_fused_kernel(%arg0: i32, %arg1: memref<2x8x256xf32, #tpu.memory_space<vmem>>, %arg2: memref<9x8x1xf32, #tpu.memory_space<vmem>>, %arg3: memref<8x1xf32, #tpu.memory_space<vmem>>, %arg4: memref<16x8xf32, #tpu.memory_space<vmem>>, %arg5: memref<16x1xf32, #tpu.memory_space<vmem>>, %arg6: memref<2x16x256xf32, #tpu.memory_space<vmem>>) attributes {dimension_semantics = [#tpu.dimension_semantics<parallel>], iteration_bounds = array<i64: 1>, scalar_prefetch = 0 : i64, scratch_operands = 0 : i64, tpu.core_type = #tpu.core_type<tc>, window_params = [{transform_indices = @transform_0, window_bounds = array<i64: 2, 8, 256>}, {pipeline_mode = #tpu.pipeline_mode<synchronous>, transform_indices = @transform_1, window_bounds = array<i64: 9, 8, 1>}, {pipeline_mode = #tpu.pipeline_mode<synchronous>, transform_indices = @transform_2, window_bounds = array<i64: 8, 1>}, {pipeline_mode = #tpu.pipeline_mode<synchronous>, transform_indices = @transform_3, window_bounds = array<i64: 16, 8>}, {pipeline_mode = #tpu.pipeline_mode<synchronous>, transform_indices = @transform_4, window_bounds = array<i64: 16, 1>}, {transform_indices = @transform_5, window_bounds = array<i64: 2, 16, 256>}]} {
    %c0 = arith.constant 0 : index
    %c0_0 = arith.constant 0 : index
    %c0_1 = arith.constant 0 : index
    %0 = vector.load %arg1[%c0, %c0_0, %c0_1] : memref<2x8x256xf32, #tpu.memory_space<vmem>>, vector<2x8x256xf32>
    %c0_2 = arith.constant 0 : index
    %c0_3 = arith.constant 0 : index
    %c0_4 = arith.constant 0 : index
    %1 = vector.load %arg2[%c0_2, %c0_3, %c0_4] : memref<9x8x1xf32, #tpu.memory_space<vmem>>, vector<9x8x1xf32>
    %2 = tpu.iota {dimensions = array<i32: 1>} : vector<1x256xi32>
    %c16_i32 = arith.constant 16 : i32
    %c0_i32 = arith.constant 0 : i32
    %3 = arith.cmpi eq, %c16_i32, %c0_i32 : i32
    %c1_i32 = arith.constant 1 : i32
    %4 = arith.select %3, %c1_i32, %c16_i32 : i32
    %5 = vector.broadcast %4 : i32 to vector<1x256xi32>
    %6 = arith.remsi %2, %5 : vector<1x256xi32>
    %c0_i32_5 = arith.constant 0 : i32
    %7 = vector.broadcast %c0_i32_5 : i32 to vector<1x256xi32>
    %8 = arith.cmpi ne, %6, %7 : vector<1x256xi32>
    %c0_i32_6 = arith.constant 0 : i32
    %9 = vector.broadcast %c0_i32_6 : i32 to vector<1x256xi32>
    %10 = arith.cmpi slt, %6, %9 : vector<1x256xi32>
    %c0_i32_7 = arith.constant 0 : i32
    %11 = arith.cmpi slt, %4, %c0_i32_7 : i32
    %12 = vector.broadcast %11 : i1 to vector<1x256xi1>
    %13 = vector.broadcast %12 : vector<1x256xi1> to vector<1x256xi1>
    %14 = arith.xori %10, %13 : vector<1x256xi1>
    %15 = arith.andi %14, %8 : vector<1x256xi1>
    %16 = vector.broadcast %4 : i32 to vector<1x256xi32>
    %17 = arith.addi %6, %16 : vector<1x256xi32>
    %18 = arith.select %15, %17, %6 : vector<1x256xi1>, vector<1x256xi32>
    %c16_i32_8 = arith.constant 16 : i32
    %19 = vector.broadcast %c16_i32_8 : i32 to vector<1x256xi32>
    %20 = arith.cmpi sge, %2, %19 : vector<1x256xi32>
    %c240_i32 = arith.constant 240 : i32
    %21 = vector.broadcast %c240_i32 : i32 to vector<1x256xi32>
    %22 = arith.cmpi slt, %2, %21 : vector<1x256xi32>
    %c0_i32_9 = arith.constant 0 : i32
    %23 = vector.broadcast %c0_i32_9 : i32 to vector<1x256xi32>
    %24 = arith.cmpi eq, %18, %23 : vector<1x256xi32>
    %c1_i32_10 = arith.constant 1 : i32
    %25 = tpu.dynamic_rotate %0 by %c1_i32_10 dim 2 : vector<2x8x256xf32>, i32 -> vector<2x8x256xf32>
    %cst = arith.constant 0.000000e+00 : f32
    %26 = vector.shape_cast %24 : vector<1x256xi1> to vector<1x1x256xi1>
    %27 = vector.broadcast %26 : vector<1x1x256xi1> to vector<2x8x256xi1>
    %28 = vector.broadcast %cst : f32 to vector<2x8x256xf32>
    %29 = arith.select %27, %28, %25 : vector<2x8x256xi1>, vector<2x8x256xf32>
    %c15_i32 = arith.constant 15 : i32
    %30 = vector.broadcast %c15_i32 : i32 to vector<1x256xi32>
    %31 = arith.cmpi eq, %18, %30 : vector<1x256xi32>
    %c255_i32 = arith.constant 255 : i32
    %32 = tpu.dynamic_rotate %0 by %c255_i32 dim 2 : vector<2x8x256xf32>, i32 -> vector<2x8x256xf32>
    %cst_11 = arith.constant 0.000000e+00 : f32
    %33 = vector.shape_cast %31 : vector<1x256xi1> to vector<1x1x256xi1>
    %34 = vector.broadcast %33 : vector<1x1x256xi1> to vector<2x8x256xi1>
    %35 = vector.broadcast %cst_11 : f32 to vector<2x8x256xf32>
    %36 = arith.select %34, %35, %32 : vector<2x8x256xi1>, vector<2x8x256xf32>
    %c0_12 = arith.constant 0 : index
    %c0_13 = arith.constant 0 : index
    %37 = vector.load %arg3[%c0_12, %c0_13] : memref<8x1xf32, #tpu.memory_space<vmem>>, vector<8x1xf32>
    %38 = vector.shape_cast %37 : vector<8x1xf32> to vector<1x8x1xf32>
    %39 = vector.broadcast %38 : vector<1x8x1xf32> to vector<2x8x256xf32>
    %c16_i32_14 = arith.constant 16 : i32
    %40 = tpu.dynamic_rotate %29 by %c16_i32_14 dim 2 : vector<2x8x256xf32>, i32 -> vector<2x8x256xf32>
    %cst_15 = arith.constant 0.000000e+00 : f32
    %41 = vector.shape_cast %20 : vector<1x256xi1> to vector<1x1x256xi1>
    %42 = vector.broadcast %41 : vector<1x1x256xi1> to vector<2x8x256xi1>
    %43 = vector.broadcast %cst_15 : f32 to vector<2x8x256xf32>
    %44 = arith.select %42, %40, %43 : vector<2x8x256xi1>, vector<2x8x256xf32>
    %45 = vector.extract_strided_slice %1 {offsets = [0, 0, 0], sizes = [1, 8, 1], strides = [1, 1, 1]} : vector<9x8x1xf32> to vector<1x8x1xf32>
    %46 = vector.shape_cast %45 : vector<1x8x1xf32> to vector<8x1xf32>
    %47 = vector.shape_cast %46 : vector<8x1xf32> to vector<1x8x1xf32>
    %48 = vector.broadcast %47 : vector<1x8x1xf32> to vector<2x8x256xf32>
    %49 = arith.mulf %44, %48 : vector<2x8x256xf32>
    %50 = arith.addf %39, %49 : vector<2x8x256xf32>
    %51 = vector.extract_strided_slice %1 {offsets = [3, 0, 0], sizes = [1, 8, 1], strides = [1, 1, 1]} : vector<9x8x1xf32> to vector<1x8x1xf32>
    %52 = vector.shape_cast %51 : vector<1x8x1xf32> to vector<8x1xf32>
    %53 = vector.shape_cast %52 : vector<8x1xf32> to vector<1x8x1xf32>
    %54 = vector.broadcast %53 : vector<1x8x1xf32> to vector<2x8x256xf32>
    %55 = arith.mulf %29, %54 : vector<2x8x256xf32>
    %56 = arith.addf %50, %55 : vector<2x8x256xf32>
    %c240_i32_16 = arith.constant 240 : i32
    %57 = tpu.dynamic_rotate %29 by %c240_i32_16 dim 2 : vector<2x8x256xf32>, i32 -> vector<2x8x256xf32>
    %cst_17 = arith.constant 0.000000e+00 : f32
    %58 = vector.shape_cast %22 : vector<1x256xi1> to vector<1x1x256xi1>
    %59 = vector.broadcast %58 : vector<1x1x256xi1> to vector<2x8x256xi1>
    %60 = vector.broadcast %cst_17 : f32 to vector<2x8x256xf32>
    %61 = arith.select %59, %57, %60 : vector<2x8x256xi1>, vector<2x8x256xf32>
    %62 = vector.extract_strided_slice %1 {offsets = [6, 0, 0], sizes = [1, 8, 1], strides = [1, 1, 1]} : vector<9x8x1xf32> to vector<1x8x1xf32>
    %63 = vector.shape_cast %62 : vector<1x8x1xf32> to vector<8x1xf32>
    %64 = vector.shape_cast %63 : vector<8x1xf32> to vector<1x8x1xf32>
    %65 = vector.broadcast %64 : vector<1x8x1xf32> to vector<2x8x256xf32>
    %66 = arith.mulf %61, %65 : vector<2x8x256xf32>
    %67 = arith.addf %56, %66 : vector<2x8x256xf32>
    %c16_i32_18 = arith.constant 16 : i32
    %68 = tpu.dynamic_rotate %0 by %c16_i32_18 dim 2 : vector<2x8x256xf32>, i32 -> vector<2x8x256xf32>
    %cst_19 = arith.constant 0.000000e+00 : f32
    %69 = vector.shape_cast %20 : vector<1x256xi1> to vector<1x1x256xi1>
    %70 = vector.broadcast %69 : vector<1x1x256xi1> to vector<2x8x256xi1>
    %71 = vector.broadcast %cst_19 : f32 to vector<2x8x256xf32>
    %72 = arith.select %70, %68, %71 : vector<2x8x256xi1>, vector<2x8x256xf32>
    %73 = vector.extract_strided_slice %1 {offsets = [1, 0, 0], sizes = [1, 8, 1], strides = [1, 1, 1]} : vector<9x8x1xf32> to vector<1x8x1xf32>
    %74 = vector.shape_cast %73 : vector<1x8x1xf32> to vector<8x1xf32>
    %75 = vector.shape_cast %74 : vector<8x1xf32> to vector<1x8x1xf32>
    %76 = vector.broadcast %75 : vector<1x8x1xf32> to vector<2x8x256xf32>
    %77 = arith.mulf %72, %76 : vector<2x8x256xf32>
    %78 = arith.addf %67, %77 : vector<2x8x256xf32>
    %79 = vector.extract_strided_slice %1 {offsets = [4, 0, 0], sizes = [1, 8, 1], strides = [1, 1, 1]} : vector<9x8x1xf32> to vector<1x8x1xf32>
    %80 = vector.shape_cast %79 : vector<1x8x1xf32> to vector<8x1xf32>
    %81 = vector.shape_cast %80 : vector<8x1xf32> to vector<1x8x1xf32>
    %82 = vector.broadcast %81 : vector<1x8x1xf32> to vector<2x8x256xf32>
    %83 = arith.mulf %0, %82 : vector<2x8x256xf32>
    %84 = arith.addf %78, %83 : vector<2x8x256xf32>
    %c240_i32_20 = arith.constant 240 : i32
    %85 = tpu.dynamic_rotate %0 by %c240_i32_20 dim 2 : vector<2x8x256xf32>, i32 -> vector<2x8x256xf32>
    %cst_21 = arith.constant 0.000000e+00 : f32
    %86 = vector.shape_cast %22 : vector<1x256xi1> to vector<1x1x256xi1>
    %87 = vector.broadcast %86 : vector<1x1x256xi1> to vector<2x8x256xi1>
    %88 = vector.broadcast %cst_21 : f32 to vector<2x8x256xf32>
    %89 = arith.select %87, %85, %88 : vector<2x8x256xi1>, vector<2x8x256xf32>
    %90 = vector.extract_strided_slice %1 {offsets = [7, 0, 0], sizes = [1, 8, 1], strides = [1, 1, 1]} : vector<9x8x1xf32> to vector<1x8x1xf32>
    %91 = vector.shape_cast %90 : vector<1x8x1xf32> to vector<8x1xf32>
    %92 = vector.shape_cast %91 : vector<8x1xf32> to vector<1x8x1xf32>
    %93 = vector.broadcast %92 : vector<1x8x1xf32> to vector<2x8x256xf32>
    %94 = arith.mulf %89, %93 : vector<2x8x256xf32>
    %95 = arith.addf %84, %94 : vector<2x8x256xf32>
    %c16_i32_22 = arith.constant 16 : i32
    %96 = tpu.dynamic_rotate %36 by %c16_i32_22 dim 2 : vector<2x8x256xf32>, i32 -> vector<2x8x256xf32>
    %cst_23 = arith.constant 0.000000e+00 : f32
    %97 = vector.shape_cast %20 : vector<1x256xi1> to vector<1x1x256xi1>
    %98 = vector.broadcast %97 : vector<1x1x256xi1> to vector<2x8x256xi1>
    %99 = vector.broadcast %cst_23 : f32 to vector<2x8x256xf32>
    %100 = arith.select %98, %96, %99 : vector<2x8x256xi1>, vector<2x8x256xf32>
    %101 = vector.extract_strided_slice %1 {offsets = [2, 0, 0], sizes = [1, 8, 1], strides = [1, 1, 1]} : vector<9x8x1xf32> to vector<1x8x1xf32>
    %102 = vector.shape_cast %101 : vector<1x8x1xf32> to vector<8x1xf32>
    %103 = vector.shape_cast %102 : vector<8x1xf32> to vector<1x8x1xf32>
    %104 = vector.broadcast %103 : vector<1x8x1xf32> to vector<2x8x256xf32>
    %105 = arith.mulf %100, %104 : vector<2x8x256xf32>
    %106 = arith.addf %95, %105 : vector<2x8x256xf32>
    %107 = vector.extract_strided_slice %1 {offsets = [5, 0, 0], sizes = [1, 8, 1], strides = [1, 1, 1]} : vector<9x8x1xf32> to vector<1x8x1xf32>
    %108 = vector.shape_cast %107 : vector<1x8x1xf32> to vector<8x1xf32>
    %109 = vector.shape_cast %108 : vector<8x1xf32> to vector<1x8x1xf32>
    %110 = vector.broadcast %109 : vector<1x8x1xf32> to vector<2x8x256xf32>
    %111 = arith.mulf %36, %110 : vector<2x8x256xf32>
    %112 = arith.addf %106, %111 : vector<2x8x256xf32>
    %c240_i32_24 = arith.constant 240 : i32
    %113 = tpu.dynamic_rotate %36 by %c240_i32_24 dim 2 : vector<2x8x256xf32>, i32 -> vector<2x8x256xf32>
    %cst_25 = arith.constant 0.000000e+00 : f32
    %114 = vector.shape_cast %22 : vector<1x256xi1> to vector<1x1x256xi1>
    %115 = vector.broadcast %114 : vector<1x1x256xi1> to vector<2x8x256xi1>
    %116 = vector.broadcast %cst_25 : f32 to vector<2x8x256xf32>
    %117 = arith.select %115, %113, %116 : vector<2x8x256xi1>, vector<2x8x256xf32>
    %118 = vector.extract_strided_slice %1 {offsets = [8, 0, 0], sizes = [1, 8, 1], strides = [1, 1, 1]} : vector<9x8x1xf32> to vector<1x8x1xf32>
    %119 = vector.shape_cast %118 : vector<1x8x1xf32> to vector<8x1xf32>
    %120 = vector.shape_cast %119 : vector<8x1xf32> to vector<1x8x1xf32>
    %121 = vector.broadcast %120 : vector<1x8x1xf32> to vector<2x8x256xf32>
    %122 = arith.mulf %117, %121 : vector<2x8x256xf32>
    %123 = arith.addf %112, %122 : vector<2x8x256xf32>
    %cst_26 = arith.constant 0.000000e+00 : f32
    %cst_27 = arith.constant 6.000000e+00 : f32
    %124 = vector.broadcast %cst_26 : f32 to vector<2x8x256xf32>
    %125 = arith.maximumf %124, %123 : vector<2x8x256xf32>
    %126 = vector.broadcast %cst_27 : f32 to vector<2x8x256xf32>
    %127 = arith.minimumf %126, %125 : vector<2x8x256xf32>
    %c0_28 = arith.constant 0 : index
    %c0_29 = arith.constant 0 : index
    %128 = vector.load %arg4[%c0_28, %c0_29] : memref<16x8xf32, #tpu.memory_space<vmem>>, vector<16x8xf32>
    %c0_30 = arith.constant 0 : index
    %c0_31 = arith.constant 0 : index
    %129 = vector.load %arg5[%c0_30, %c0_31] : memref<16x1xf32, #tpu.memory_space<vmem>>, vector<16x1xf32>
    %130 = vector.extract_strided_slice %127 {offsets = [0, 0, 0], sizes = [1, 8, 256], strides = [1, 1, 1]} : vector<2x8x256xf32> to vector<1x8x256xf32>
    %131 = vector.shape_cast %130 : vector<1x8x256xf32> to vector<8x256xf32>
    %cst_32 = arith.constant dense<0.000000e+00> : vector<16x256xf32>
    %132 = tpu.matmul %128, %131, %cst_32 {dimension_numbers = #tpu.dot_dimension_numbers<[1], [0], [0], [1], [0, 0, 1, 1], [], []>} : vector<16x8xf32>, vector<8x256xf32>, vector<16x256xf32> -> vector<16x256xf32>
    %133 = vector.broadcast %129 : vector<16x1xf32> to vector<16x256xf32>
    %134 = arith.addf %132, %133 : vector<16x256xf32>
    %c0_33 = arith.constant 0 : index
    %c0_34 = arith.constant 0 : index
    %c0_35 = arith.constant 0 : index
    %135 = vector.load %arg6[%c0_33, %c0_34, %c0_35] : memref<2x16x256xf32, #tpu.memory_space<vmem>>, vector<1x16x256xf32>
    %136 = vector.shape_cast %135 : vector<1x16x256xf32> to vector<16x256xf32>
    %137 = vector.shape_cast %134 : vector<16x256xf32> to vector<1x16x256xf32>
    tpu.vector_store %arg6[%c0_33, %c0_34, %c0_35], %137 {strides = array<i32>} : memref<2x16x256xf32, #tpu.memory_space<vmem>>, vector<1x16x256xf32>,
    %138 = vector.extract_strided_slice %127 {offsets = [1, 0, 0], sizes = [1, 8, 256], strides = [1, 1, 1]} : vector<2x8x256xf32> to vector<1x8x256xf32>
    %139 = vector.shape_cast %138 : vector<1x8x256xf32> to vector<8x256xf32>
    %cst_36 = arith.constant dense<0.000000e+00> : vector<16x256xf32>
    %140 = tpu.matmul %128, %139, %cst_36 {dimension_numbers = #tpu.dot_dimension_numbers<[1], [0], [0], [1], [0, 0, 1, 1], [], []>} : vector<16x8xf32>, vector<8x256xf32>, vector<16x256xf32> -> vector<16x256xf32>
    %141 = vector.broadcast %129 : vector<16x1xf32> to vector<16x256xf32>
    %142 = arith.addf %140, %141 : vector<16x256xf32>
    %c1 = arith.constant 1 : index
    %c0_37 = arith.constant 0 : index
    %c0_38 = arith.constant 0 : index
    %143 = vector.load %arg6[%c1, %c0_37, %c0_38] : memref<2x16x256xf32, #tpu.memory_space<vmem>>, vector<1x16x256xf32>
    %144 = vector.shape_cast %143 : vector<1x16x256xf32> to vector<16x256xf32>
    %145 = vector.shape_cast %142 : vector<16x256xf32> to vector<1x16x256xf32>
    tpu.vector_store %arg6[%c1, %c0_37, %c0_38], %145 {strides = array<i32>} : memref<2x16x256xf32, #tpu.memory_space<vmem>>, vector<1x16x256xf32>,
    return
  }
  func.func @transform_0(%arg0: i32) -> (i32, i32, i32) {
    %c0_i32 = arith.constant 0 : i32
    %c0_i32_0 = arith.constant 0 : i32
    %c0_i32_1 = arith.constant 0 : i32
    return %arg0, %c0_i32, %c0_i32_0 : i32, i32, i32
  }
  func.func @transform_1(%arg0: i32) -> (i32, i32, i32) {
    %c0_i32 = arith.constant 0 : i32
    %c0_i32_0 = arith.constant 0 : i32
    %c0_i32_1 = arith.constant 0 : i32
    %c0_i32_2 = arith.constant 0 : i32
    return %c0_i32, %c0_i32_0, %c0_i32_1 : i32, i32, i32
  }
  func.func @transform_2(%arg0: i32) -> (i32, i32) {
    %c0_i32 = arith.constant 0 : i32
    %c0_i32_0 = arith.constant 0 : i32
    %c0_i32_1 = arith.constant 0 : i32
    return %c0_i32, %c0_i32_0 : i32, i32
  }
  func.func @transform_3(%arg0: i32) -> (i32, i32) {
    %c0_i32 = arith.constant 0 : i32
    %c0_i32_0 = arith.constant 0 : i32
    %c0_i32_1 = arith.constant 0 : i32
    return %c0_i32, %c0_i32_0 : i32, i32
  }
  func.func @transform_4(%arg0: i32) -> (i32, i32) {
    %c0_i32 = arith.constant 0 : i32
    %c0_i32_0 = arith.constant 0 : i32
    %c0_i32_1 = arith.constant 0 : i32
    return %c0_i32, %c0_i32_0 : i32, i32
  }
  func.func @transform_5(%arg0: i32) -> (i32, i32, i32) {
    %c0_i32 = arith.constant 0 : i32
    %c0_i32_0 = arith.constant 0 : i32
    %c0_i32_1 = arith.constant 0 : i32
    return %arg0, %c0_i32, %c0_i32_0 : i32, i32, i32
  }
}

</mosaic_0001>

<llo_original>
// kernel: tpu_custom_call.1
$region0: #{tpu_custom_call.1}
  #allocation0 [shape = 'u32[]', space=smem, size = 0x4, offset = 0x4, fixed_abs, tag = 'smem constant byte address 0x4 - core index']
  #allocation1 [shape = 'u32[144,128]{1,0:T(1,128)}', space=vmem, size = 0x12000, scoped, tag = 'internal scratch']
  %s0 = inlined_call_operand.vmem [shape: f32[2,8,256], index: 0, kind: input, shape index: {}]
  %s1 = inlined_call_operand.vmem [shape: f32[9,8,1], index: 1, kind: input, shape index: {}]
  %s2 = inlined_call_operand.vmem [shape: f32[8,1], index: 2, kind: input, shape index: {}]
  %s3 = inlined_call_operand.vmem [shape: f32[16,8], index: 3, kind: input, shape index: {}]
  %s4 = inlined_call_operand.vmem [shape: f32[16,1], index: 4, kind: input, shape index: {}]
  %s5 = inlined_call_operand.hbm [shape: f32[2,16,256], index: 5, kind: output, shape index: {}]
  %s6 = sld [smem:[#allocation0]]
  $region30: #{tpu_custom_call.1} parent=0
    _
  %s8 = ssub.s32 1, %s6
  %s9 = scalar_select 0, %s8, %s6
  $region1: #{tpu_custom_call.1} parent=0
    #allocation2 [shape = 'u8[32768]{0}', space=vmem, size = 0x8000, scoped, tag = 'output window, operand 0, single buffered']
    #allocation3 [shape = 's32[1]{0}', space=sflag, size = 0x4, scoped, tag = 'scoped memory for tpu_custom_call.1']
    %10 = vsyncpa [#allocation3], 0
    // Predicated region
    $region2: #{tpu_custom_call.1} parent=1 // pred_check
      _
    $region3: #{tpu_custom_call.1} parent=1 // pred_check_branch
      %12 = sbr.rel (0) target = $region5
    $region4: #{tpu_custom_call.1} parent=1 // pred_region
      _
    $region5: #{tpu_custom_call.1} parent=1 // pred_fallthru
      _
    // Predicated region
    $region6: #{tpu_custom_call.1} parent=1 // pred_check
      _
    $region7: #{tpu_custom_call.1} parent=1 // pred_check_branch
      %14 = sbr.rel (0) target = $region9
    $region8: #{tpu_custom_call.1} parent=1 // pred_region
      _
    $region9: #{tpu_custom_call.1} parent=1 // pred_fallthru
      _
    // Predicated region
    $region10: #{tpu_custom_call.1} parent=1 // pred_check
      _
    $region11: #{tpu_custom_call.1} parent=1 // pred_check_branch
      %16 = sbr.rel (0) target = $region13
    $region12: #{tpu_custom_call.1} parent=1 // pred_region
      _
    $region13: #{tpu_custom_call.1} parent=1 // pred_fallthru
      _
    // Predicated region
    $region14: #{tpu_custom_call.1} parent=1 // pred_check
      _
    $region15: #{tpu_custom_call.1} parent=1 // pred_check_branch
      %18 = sbr.rel (0) target = $region17
    $region16: #{tpu_custom_call.1} parent=1 // pred_region
      _
    $region17: #{tpu_custom_call.1} parent=1 // pred_fallthru
      _
    // Predicated region
    $region18: #{tpu_custom_call.1} parent=1 // pred_check
      _
    $region19: #{tpu_custom_call.1} parent=1 // pred_check_branch
      %20 = sbr.rel (0) target = $region21
    $region20: #{tpu_custom_call.1} parent=1 // pred_region
      _
    $region21: #{tpu_custom_call.1} parent=1 // pred_fallthru
      _
    %v21 = vld [vmem:[%s0] sm:$0xff]
    %v22 = vld [vmem:[%s0 + $0x8] sm:$0xff]
    %v23 = vld [vmem:[%s0 + $0x10] sm:$0xff]
    %v24 = vld [vmem:[%s0 + $0x18] sm:$0xff]
    %v25 = vld [vmem:[%s1] sm:$0xff]
    %v26 = vld [vmem:[%s1 + $0x8] sm:$0xff]
    %v27 = vld [vmem:[%s1 + $0x10] sm:$0xff]
    %v28 = vld [vmem:[%s1 + $0x18] sm:$0xff]
    %v29 = vld [vmem:[%s1 + $0x20] sm:$0xff]
    %v30 = vld [vmem:[%s1 + $0x28] sm:$0xff]
    %v31 = vld [vmem:[%s1 + $0x30] sm:$0xff]
    %v32 = vld [vmem:[%s1 + $0x38] sm:$0xff]
    %v33 = vld [vmem:[%s1 + $0x40] sm:$0xff]
    %v34 = vlaneseq
    %v35 = vand.u32 %v34, 127
    %v36 = vadd.s32 %v35, 128
    %vm37 = vcmp.lt.s32.totalorder %v35, 0
    %v38 = vsub.s32 0, %v35
    %v39 = vsel %vm37, %v38, %v35
    %v40 = vshrl.u32 %v39, 4
    %v41 = vand.u32 %v39, 15
    %v42 = vsub.s32 0, %v41
    %v43 = vsel %vm37, %v42, %v41
    %vm44 = vcmp.lt.s32.totalorder %v36, 0
    %v45 = vsub.s32 0, %v36
    %v46 = vsel %vm44, %v45, %v36
    %v47 = vshrl.u32 %v46, 4
    %v48 = vand.u32 %v46, 15
    %v49 = vsub.s32 0, %v48
    %v50 = vsel %vm44, %v49, %v48
    %vm51 = vcmp.ne.s32.totalorder %v43, 0
    %vm52 = vcmp.ne.s32.totalorder %v50, 0
    %vm53 = vcmp.lt.s32.totalorder %v43, 0
    %vm54 = vcmp.lt.s32.totalorder %v50, 0
    %vm55 = vmand %vm53, %vm51
    %vm56 = vmand %vm54, %vm52
    %v57 = vadd.s32 %v43, 16
    %v58 = vadd.s32 %v50, 16
    %v59 = vsel %vm55, %v57, %v43
    %v60 = vsel %vm56, %v58, %v50
    %vm61 = vcmp.ge.s32.totalorder %v35, 16
    %vm62 = vcmp.ge.s32.totalorder %v36, 16
    %vm63 = vcmp.lt.s32.totalorder %v35, 240
    %vm64 = vcmp.lt.s32.totalorder %v36, 240
    %vm65 = vcmp.eq.s32.totalorder %v59, 0
    %vm66 = vcmp.eq.s32.totalorder %v60, 0
    %67 = vrot.lane.b32.xlu0 %v21, 1
    %v68 = vpop.permute.xlu0 %67
    %69 = vrot.lane.b32.xlu0 %v23, 1
    %v70 = vpop.permute.xlu0 %69
    %71 = vrot.lane.b32.xlu0 %v22, 1
    %v72 = vpop.permute.xlu0 %71
    %73 = vrot.lane.b32.xlu0 %v24, 1
    %v74 = vpop.permute.xlu0 %73
    %vm75 = vcmp.lt.s32.totalorder %v35, 1
    %v76 = vsel %vm75, %v68, %v72
    %v77 = vsel %vm75, %v70, %v74
    %v78 = vsel %vm75, %v72, %v68
    %v79 = vsel %vm75, %v74, %v70
    %v80 = vsel %vm65, 1, 0
    %v81 = vsel %vm66, 1, 0
    %vm82 = vcmp.eq.s32.totalorder %v80, 1
    %vm83 = vcmp.eq.s32.totalorder %v81, 1
    %v84 = vsel %vm82, 0.0, %v78
    %v85 = vsel %vm83, 0.0, %v76
    %v86 = vsel %vm82, 0.0, %v79
    %v87 = vsel %vm83, 0.0, %v77
    %vm88 = vcmp.eq.s32.totalorder %v59, 15
    %vm89 = vcmp.eq.s32.totalorder %v60, 15
    %90 = vrot.lane.b32.xlu0 %v21, 127
    %v91 = vpop.permute.xlu0 %90
    %92 = vrot.lane.b32.xlu0 %v23, 127
    %v93 = vpop.permute.xlu0 %92
    %94 = vrot.lane.b32.xlu0 %v22, 127
    %v95 = vpop.permute.xlu0 %94
    %96 = vrot.lane.b32.xlu0 %v24, 127
    %v97 = vpop.permute.xlu0 %96
    %vm98 = vcmp.lt.s32.totalorder %v35, 127
    %v99 = vsel %vm98, %v91, %v95
    %v100 = vsel %vm98, %v93, %v97
    %v101 = vsel %vm98, %v95, %v91
    %v102 = vsel %vm98, %v97, %v93
    %v103 = vsel %vm88, 1, 0
    %v104 = vsel %vm89, 1, 0
    %vm105 = vcmp.eq.s32.totalorder %v103, 1
    %vm106 = vcmp.eq.s32.totalorder %v104, 1
    %v107 = vsel %vm105, 0.0, %v99
    %v108 = vsel %vm106, 0.0, %v101
    %v109 = vsel %vm105, 0.0, %v100
    %v110 = vsel %vm106, 0.0, %v102
    %v111 = vld [vmem:[%s2] sm:$0xff]
    %113 = vset.pattern.permute.xlu0 0
    %114 = vperm.xlu0 %113, %v111
    %v115 = vpop.permute.xlu0 %114
    %117 = vrot.lane.b32.xlu0 %v84, 16
    %v118 = vpop.permute.xlu0 %117
    %119 = vrot.lane.b32.xlu0 %v86, 16
    %v120 = vpop.permute.xlu0 %119
    %121 = vrot.lane.b32.xlu0 %v85, 16
    %v122 = vpop.permute.xlu0 %121
    %123 = vrot.lane.b32.xlu0 %v87, 16
    %v124 = vpop.permute.xlu0 %123
    %vm125 = vcmp.lt.s32.totalorder %v35, 16
    %v126 = vsel %vm125, %v118, %v122
    %v127 = vsel %vm125, %v120, %v124
    %v128 = vsel %vm125, %v122, %v118
    %v129 = vsel %vm125, %v124, %v120
    %v130 = vsel %vm61, 1, 0
    %v131 = vsel %vm62, 1, 0
    %vm132 = vcmp.eq.s32.totalorder %v130, 1
    %vm133 = vcmp.eq.s32.totalorder %v131, 1
    %v134 = vsel %vm132, %v128, 0.0
    %v135 = vsel %vm133, %v126, 0.0
    %v136 = vsel %vm132, %v129, 0.0
    %v137 = vsel %vm133, %v127, 0.0
    %139 = vset.pattern.permute.xlu0 0
    %140 = vperm.xlu0 %139, %v25
    %v141 = vpop.permute.xlu0 %140
    %v143 = vmul.f32 %v134, %v141
    %v144 = vmul.f32 %v135, %v141
    %v145 = vmul.f32 %v136, %v141
    %v146 = vmul.f32 %v137, %v141
    %v147 = vadd.f32 %v115, %v143
    %v148 = vadd.f32 %v115, %v144
    %v149 = vadd.f32 %v115, %v145
    %v150 = vadd.f32 %v115, %v146
    %152 = vset.pattern.permute.xlu0 0
    %153 = vperm.xlu0 %152, %v28
    %v154 = vpop.permute.xlu0 %153
    %v156 = vmul.f32 %v84, %v154
    %v157 = vmul.f32 %v85, %v154
    %v158 = vmul.f32 %v86, %v154
    %v159 = vmul.f32 %v87, %v154
    %v160 = vadd.f32 %v147, %v156
    %v161 = vadd.f32 %v148, %v157
    %v162 = vadd.f32 %v149, %v158
    %v163 = vadd.f32 %v150, %v159
    %164 = vrot.lane.b32.xlu0 %v84, 112
    %v165 = vpop.permute.xlu0 %164
    %166 = vrot.lane.b32.xlu0 %v86, 112
    %v167 = vpop.permute.xlu0 %166
    %168 = vrot.lane.b32.xlu0 %v85, 112
    %v169 = vpop.permute.xlu0 %168
    %170 = vrot.lane.b32.xlu0 %v87, 112
    %v171 = vpop.permute.xlu0 %170
    %vm172 = vcmp.lt.s32.totalorder %v35, 112
    %v173 = vsel %vm172, %v165, %v169
    %v174 = vsel %vm172, %v167, %v171
    %v175 = vsel %vm172, %v169, %v165
    %v176 = vsel %vm172, %v171, %v167
    %v177 = vsel %vm63, 1, 0
    %v178 = vsel %vm64, 1, 0
    %vm179 = vcmp.eq.s32.totalorder %v177, 1
    %vm180 = vcmp.eq.s32.totalorder %v178, 1
    %v181 = vsel %vm179, %v173, 0.0
    %v182 = vsel %vm180, %v175, 0.0
    %v183 = vsel %vm179, %v174, 0.0
    %v184 = vsel %vm180, %v176, 0.0
    %186 = vset.pattern.permute.xlu0 0
    %187 = vperm.xlu0 %186, %v31
    %v188 = vpop.permute.xlu0 %187
    %v190 = vmul.f32 %v181, %v188
    %v191 = vmul.f32 %v182, %v188
    %v192 = vmul.f32 %v183, %v188
    %v193 = vmul.f32 %v184, %v188
    %v194 = vadd.f32 %v160, %v190
    %v195 = vadd.f32 %v161, %v191
    %v196 = vadd.f32 %v162, %v192
    %v197 = vadd.f32 %v163, %v193
    %198 = vrot.lane.b32.xlu0 %v21, 16
    %v199 = vpop.permute.xlu0 %198
    %200 = vrot.lane.b32.xlu0 %v23, 16
    %v201 = vpop.permute.xlu0 %200
    %202 = vrot.lane.b32.xlu0 %v22, 16
    %v203 = vpop.permute.xlu0 %202
    %204 = vrot.lane.b32.xlu0 %v24, 16
    %v205 = vpop.permute.xlu0 %204
    %v206 = vsel %vm125, %v199, %v203
    %v207 = vsel %vm125, %v201, %v205
    %v208 = vsel %vm125, %v203, %v199
    %v209 = vsel %vm125, %v205, %v201
    %v210 = vsel %vm132, %v208, 0.0
    %v211 = vsel %vm133, %v206, 0.0
    %v212 = vsel %vm132, %v209, 0.0
    %v213 = vsel %vm133, %v207, 0.0
    %215 = vset.pattern.permute.xlu0 0
    %216 = vperm.xlu0 %215, %v26
    %v217 = vpop.permute.xlu0 %216
    %v219 = vmul.f32 %v210, %v217
    %v220 = vmul.f32 %v211, %v217
    %v221 = vmul.f32 %v212, %v217
    %v222 = vmul.f32 %v213, %v217
    %v223 = vadd.f32 %v194, %v219
    %v224 = vadd.f32 %v195, %v220
    %v225 = vadd.f32 %v196, %v221
    %v226 = vadd.f32 %v197, %v222
    %228 = vset.pattern.permute.xlu0 0
    %229 = vperm.xlu0 %228, %v29
    %v230 = vpop.permute.xlu0 %229
    %v232 = vmul.f32 %v21, %v230
    %v233 = vmul.f32 %v22, %v230
    %v234 = vmul.f32 %v23, %v230
    %v235 = vmul.f32 %v24, %v230
    %v236 = vadd.f32 %v223, %v232
    %v237 = vadd.f32 %v224, %v233
    %v238 = vadd.f32 %v225, %v234
    %v239 = vadd.f32 %v226, %v235
    %240 = vrot.lane.b32.xlu0 %v21, 112
    %v241 = vpop.permute.xlu0 %240
    %242 = vrot.lane.b32.xlu0 %v23, 112
    %v243 = vpop.permute.xlu0 %242
    %244 = vrot.lane.b32.xlu0 %v22, 112
    %v245 = vpop.permute.xlu0 %244
    %246 = vrot.lane.b32.xlu0 %v24, 112
    %v247 = vpop.permute.xlu0 %246
    %v248 = vsel %vm172, %v241, %v245
    %v249 = vsel %vm172, %v243, %v247
    %v250 = vsel %vm172, %v245, %v241
    %v251 = vsel %vm172, %v247, %v243
    %v252 = vsel %vm179, %v248, 0.0
    %v253 = vsel %vm180, %v250, 0.0
    %v254 = vsel %vm179, %v249, 0.0
    %v255 = vsel %vm180, %v251, 0.0
    %257 = vset.pattern.permute.xlu0 0
    %258 = vperm.xlu0 %257, %v32
    %v259 = vpop.permute.xlu0 %258
    %v261 = vmul.f32 %v252, %v259
    %v262 = vmul.f32 %v253, %v259
    %v263 = vmul.f32 %v254, %v259
    %v264 = vmul.f32 %v255, %v259
    %v265 = vadd.f32 %v236, %v261
    %v266 = vadd.f32 %v237, %v262
    %v267 = vadd.f32 %v238, %v263
    %v268 = vadd.f32 %v239, %v264
    %269 = vrot.lane.b32.xlu0 %v107, 16
    %v270 = vpop.permute.xlu0 %269
    %271 = vrot.lane.b32.xlu0 %v109, 16
    %v272 = vpop.permute.xlu0 %271
    %273 = vrot.lane.b32.xlu0 %v108, 16
    %v274 = vpop.permute.xlu0 %273
    %275 = vrot.lane.b32.xlu0 %v110, 16
    %v276 = vpop.permute.xlu0 %275
    %v277 = vsel %vm125, %v270, %v274
    %v278 = vsel %vm125, %v272, %v276
    %v279 = vsel %vm125, %v274, %v270
    %v280 = vsel %vm125, %v276, %v272
    %v281 = vsel %vm132, %v279, 0.0
    %v282 = vsel %vm133, %v277, 0.0
    %v283 = vsel %vm132, %v280, 0.0
    %v284 = vsel %vm133, %v278, 0.0
    %286 = vset.pattern.permute.xlu0 0
    %287 = vperm.xlu0 %286, %v27
    %v288 = vpop.permute.xlu0 %287
    %v290 = vmul.f32 %v281, %v288
    %v291 = vmul.f32 %v282, %v288
    %v292 = vmul.f32 %v283, %v288
    %v293 = vmul.f32 %v284, %v288
    %v294 = vadd.f32 %v265, %v290
    %v295 = vadd.f32 %v266, %v291
    %v296 = vadd.f32 %v267, %v292
    %v297 = vadd.f32 %v268, %v293
    %299 = vset.pattern.permute.xlu0 0
    %300 = vperm.xlu0 %299, %v30
    %v301 = vpop.permute.xlu0 %300
    %v303 = vmul.f32 %v107, %v301
    %v304 = vmul.f32 %v108, %v301
    %v305 = vmul.f32 %v109, %v301
    %v306 = vmul.f32 %v110, %v301
    %v307 = vadd.f32 %v294, %v303
    %v308 = vadd.f32 %v295, %v304
    %v309 = vadd.f32 %v296, %v305
    %v310 = vadd.f32 %v297, %v306
    %311 = vrot.lane.b32.xlu0 %v107, 112
    %v312 = vpop.permute.xlu0 %311
    %313 = vrot.lane.b32.xlu0 %v109, 112
    %v314 = vpop.permute.xlu0 %313
    %315 = vrot.lane.b32.xlu0 %v108, 112
    %v316 = vpop.permute.xlu0 %315
    %317 = vrot.lane.b32.xlu0 %v110, 112
    %v318 = vpop.permute.xlu0 %317
    %v319 = vsel %vm172, %v312, %v316
    %v320 = vsel %vm172, %v314, %v318
    %v321 = vsel %vm172, %v316, %v312
    %v322 = vsel %vm172, %v318, %v314
    %v323 = vsel %vm179, %v319, 0.0
    %v324 = vsel %vm180, %v321, 0.0
    %v325 = vsel %vm179, %v320, 0.0
    %v326 = vsel %vm180, %v322, 0.0
    %328 = vset.pattern.permute.xlu0 0
    %329 = vperm.xlu0 %328, %v33
    %v330 = vpop.permute.xlu0 %329
    %v332 = vmul.f32 %v323, %v330
    %v333 = vmul.f32 %v324, %v330
    %v334 = vmul.f32 %v325, %v330
    %v335 = vmul.f32 %v326, %v330
    %v336 = vadd.f32 %v307, %v332
    %v337 = vadd.f32 %v308, %v333
    %v338 = vadd.f32 %v309, %v334
    %v339 = vadd.f32 %v310, %v335
    %v340 = vmax.f32 %v336, 0.0
    %v341 = vmax.f32 %v337, 0.0
    %v342 = vmax.f32 %v338, 0.0
    %v343 = vmax.f32 %v339, 0.0
    %v344 = vmin.f32 %v340, 6.0
    %v345 = vmin.f32 %v341, 6.0
    %v346 = vmin.f32 %v342, 6.0
    %v347 = vmin.f32 %v343, 6.0
    %v348 = vld [vmem:[%s3] sm:$0xff]
    %v349 = vld [vmem:[%s3 + $0x8] sm:$0xff]
    %v350 = vld [vmem:[%s4] sm:$0xff]
    %v351 = vld [vmem:[%s4 + $0x8] sm:$0xff]
    %353 = vset.pattern.permute.xlu0 0
    %354 = vperm.xlu0 %353, %v350
    %v355 = vpop.permute.xlu0 %354
    %358 = vset.pattern.permute.xlu0 0
    %359 = vperm.xlu0 %358, %v351
    %v360 = vpop.permute.xlu0 %359
    %vm362 = vcmask 64512
    %v364 = vsel %vm362, %v348, 0
    %v367 = vsel %vm362, %v349, 0
    %369 = vmatprep.subr.mxu0 0.0
    %370 = vmatpush1.msra.mxu0 0.0
    %371 = vmatprep.subr.mxu0 0.0
    %372 = vmatpush1.msra.mxu0 0.0
    %373 = vmatprep.subr.mxu0 0.0
    %374 = vmatpush1.msra.mxu0 0.0
    %375 = vmatprep.subr.mxu0 0.0
    %376 = vmatpush1.msra.mxu0 0.0
    %377 = vmatprep.subr.mxu0 0.0
    %378 = vmatpush1.msra.mxu0 0.0
    %379 = vmatprep.subr.mxu0 0.0
    %380 = vmatpush1.msra.mxu0 0.0
    %381 = vmatprep.subr.mxu0 0.0
    %382 = vmatpush1.msra.mxu0 0.0
    %383 = vmatprep.subr.mxu0 0.0
    %384 = vmatpush1.msra.mxu0 0.0
    %385 = vmatprep.subr.mxu0 0.0
    %386 = vmatpush1.msra.mxu0 0.0
    %387 = vmatprep.subr.mxu0 0.0
    %388 = vmatpush1.msra.mxu0 0.0
    %389 = vmatprep.subr.mxu0 0.0
    %390 = vmatpush1.msra.mxu0 0.0
    %391 = vmatprep.subr.mxu0 0.0
    %392 = vmatpush1.msra.mxu0 0.0
    %393 = vmatprep.subr.mxu0 0.0
    %394 = vmatpush1.msra.mxu0 0.0
    %395 = vmatprep.subr.mxu0 0.0
    %396 = vmatpush1.msra.mxu0 0.0
    %397 = vmatprep.subr.mxu0 0.0
    %398 = vmatpush1.msra.mxu0 0.0
    %399 = vmatprep.subr.mxu0 %v345
    %400 = vmatpush1.msra.mxu0 %v344
    %401 = vmatprep.subr.mxu0 0.0
    %402 = vmatpush2.msra.mxu0 0.0
    %403 = vmatprep.subr.mxu0 0.0
    %404 = vmatpush2.msra.mxu0 0.0
    %405 = vmatprep.subr.mxu0 0.0
    %406 = vmatpush2.msra.mxu0 0.0
    %407 = vmatprep.subr.mxu0 0.0
    %408 = vmatpush2.msra.mxu0 0.0
    %409 = vmatprep.subr.mxu0 0.0
    %410 = vmatpush2.msra.mxu0 0.0
    %411 = vmatprep.subr.mxu0 0.0
    %412 = vmatpush2.msra.mxu0 0.0
    %413 = vmatprep.subr.mxu0 0.0
    %414 = vmatpush2.msra.mxu0 0.0
    %415 = vmatprep.subr.mxu0 0.0
    %416 = vmatpush2.msra.mxu0 0.0
    %417 = vmatprep.subr.mxu0 0.0
    %418 = vmatpush2.msra.mxu0 0.0
    %419 = vmatprep.subr.mxu0 0.0
    %420 = vmatpush2.msra.mxu0 0.0
    %421 = vmatprep.subr.mxu0 0.0
    %422 = vmatpush2.msra.mxu0 0.0
    %423 = vmatprep.subr.mxu0 0.0
    %424 = vmatpush2.msra.mxu0 0.0
    %425 = vmatprep.subr.mxu0 0.0
    %426 = vmatpush2.msra.mxu0 0.0
    %427 = vmatprep.subr.mxu0 0.0
    %428 = vmatpush2.msra.mxu0 0.0
    %429 = vmatprep.subr.mxu0 0.0
    %430 = vmatpush2.msra.mxu0 0.0
    %431 = vmatprep.subr.mxu0 0.0
    %432 = vmatpush2.msra.mxu0 0.0
    %433 = vmatprep.mubr.f32.mxu0 0.0
    %434 = vmatmul.mubr.f32.gmra.mxu0 %v364
    %v435 = vpop.f32.mrf.mxu0
    %v436 = vadd.f32 %v355, %v435
    %v437 = vpop.f32.mrf.mxu0
    %v438 = vadd.f32 %v355, %v437
    %439 = vmatprep.mubr.f32.mxu0 0.0
    %440 = vmatmul.mubr.f32.gmra.mxu0 %v367
    %v441 = vpop.f32.mrf.mxu0
    %v442 = vadd.f32 %v360, %v441
    %v443 = vpop.f32.mrf.mxu0
    %v444 = vadd.f32 %v360, %v443
    %445 = vdwg.mxu0
    %446 = vst [vmem:[#allocation2] sm:$0xff] %v436
    %447 = vst [vmem:[#allocation2 + $0x8] sm:$0xff] %v438
    %448 = vst [vmem:[#allocation2 + $0x10] sm:$0xff] %v442
    %449 = vst [vmem:[#allocation2 + $0x18] sm:$0xff] %v444
    %450 = vmatprep.subr.mxu0 0.0
    %451 = vmatpush1.msra.mxu0 0.0
    %452 = vmatprep.subr.mxu0 0.0
    %453 = vmatpush1.msra.mxu0 0.0
    %454 = vmatprep.subr.mxu0 0.0
    %455 = vmatpush1.msra.mxu0 0.0
    %456 = vmatprep.subr.mxu0 0.0
    %457 = vmatpush1.msra.mxu0 0.0
    %458 = vmatprep.subr.mxu0 0.0
    %459 = vmatpush1.msra.mxu0 0.0
    %460 = vmatprep.subr.mxu0 0.0
    %461 = vmatpush1.msra.mxu0 0.0
    %462 = vmatprep.subr.mxu0 0.0
    %463 = vmatpush1.msra.mxu0 0.0
    %464 = vmatprep.subr.mxu0 0.0
    %465 = vmatpush1.msra.mxu0 0.0
    %466 = vmatprep.subr.mxu0 0.0
    %467 = vmatpush1.msra.mxu0 0.0
    %468 = vmatprep.subr.mxu0 0.0
    %469 = vmatpush1.msra.mxu0 0.0
    %470 = vmatprep.subr.mxu0 0.0
    %471 = vmatpush1.msra.mxu0 0.0
    %472 = vmatprep.subr.mxu0 0.0
    %473 = vmatpush1.msra.mxu0 0.0
    %474 = vmatprep.subr.mxu0 0.0
    %475 = vmatpush1.msra.mxu0 0.0
    %476 = vmatprep.subr.mxu0 0.0
    %477 = vmatpush1.msra.mxu0 0.0
    %478 = vmatprep.subr.mxu0 0.0
    %479 = vmatpush1.msra.mxu0 0.0
    %480 = vmatprep.subr.mxu0 %v347
    %481 = vmatpush1.msra.mxu0 %v346
    %482 = vmatprep.subr.mxu0 0.0
    %483 = vmatpush2.msra.mxu0 0.0
    %484 = vmatprep.subr.mxu0 0.0
    %485 = vmatpush2.msra.mxu0 0.0
    %486 = vmatprep.subr.mxu0 0.0
    %487 = vmatpush2.msra.mxu0 0.0
    %488 = vmatprep.subr.mxu0 0.0
    %489 = vmatpush2.msra.mxu0 0.0
    %490 = vmatprep.subr.mxu0 0.0
    %491 = vmatpush2.msra.mxu0 0.0
    %492 = vmatprep.subr.mxu0 0.0
    %493 = vmatpush2.msra.mxu0 0.0
    %494 = vmatprep.subr.mxu0 0.0
    %495 = vmatpush2.msra.mxu0 0.0
    %496 = vmatprep.subr.mxu0 0.0
    %497 = vmatpush2.msra.mxu0 0.0
    %498 = vmatprep.subr.mxu0 0.0
    %499 = vmatpush2.msra.mxu0 0.0
    %500 = vmatprep.subr.mxu0 0.0
    %501 = vmatpush2.msra.mxu0 0.0
    %502 = vmatprep.subr.mxu0 0.0
    %503 = vmatpush2.msra.mxu0 0.0
    %504 = vmatprep.subr.mxu0 0.0
    %505 = vmatpush2.msra.mxu0 0.0
    %506 = vmatprep.subr.mxu0 0.0
    %507 = vmatpush2.msra.mxu0 0.0
    %508 = vmatprep.subr.mxu0 0.0
    %509 = vmatpush2.msra.mxu0 0.0
    %510 = vmatprep.subr.mxu0 0.0
    %511 = vmatpush2.msra.mxu0 0.0
    %512 = vmatprep.subr.mxu0 0.0
    %513 = vmatpush2.msra.mxu0 0.0
    %514 = vmatprep.mubr.f32.mxu0 0.0
    %515 = vmatmul.mubr.f32.gmra.mxu0 %v364
    %v516 = vpop.f32.mrf.mxu0
    %v517 = vadd.f32 %v355, %v516
    %v518 = vpop.f32.mrf.mxu0
    %v519 = vadd.f32 %v355, %v518
    %520 = vmatprep.mubr.f32.mxu0 0.0
    %521 = vmatmul.mubr.f32.gmra.mxu0 %v367
    %v522 = vpop.f32.mrf.mxu0
    %v523 = vadd.f32 %v360, %v522
    %v524 = vpop.f32.mrf.mxu0
    %v525 = vadd.f32 %v360, %v524
    %526 = vdwg.mxu0
    %s527 = scalar_lea.vmem [#allocation2], 32
    %528 = vst [vmem:[%s527] sm:$0xff] %v517
    %529 = vst [vmem:[%s527 + $0x8] sm:$0xff] %v519
    %530 = vst [vmem:[%s527 + $0x10] sm:$0xff] %v523
    %531 = vst [vmem:[%s527 + $0x18] sm:$0xff] %v525
    // Predicated region
    $region22: #{tpu_custom_call.1} parent=1 // pred_check
      _
    $region23: #{tpu_custom_call.1} parent=1 // pred_check_branch
      %533 = sbr.rel (0) target = $region25
    $region24: #{tpu_custom_call.1} parent=1 // pred_region
      %s535 = ssub.s32 1024, 1024
      %536 = vsyncadd [#allocation3], %s535
      %s537 = sshll.u32 [#allocation2], 4
      %s538 = int_to_ptr.vmem [resolvable:$true] %s537
      %543 = dma.vmem_to_hbm [thread:$0]  %s538, 1024, %s5, [#allocation3], 256, 256, 16
    $region25: #{tpu_custom_call.1} parent=1 // pred_fallthru
      _
    // Predicated region
    $region26: #{tpu_custom_call.1} parent=1 // pred_check
      _
    $region27: #{tpu_custom_call.1} parent=1 // pred_check_branch
      %545 = sbr.rel (0) target = $region29
    $region28: #{tpu_custom_call.1} parent=1 // pred_region
      %546 = dma.done [#allocation3], 1024
    $region29: #{tpu_custom_call.1} parent=1 // pred_fallthru
      _
    %547 = vsyncpa [#allocation3], 1

</llo_original>
